<compile_context>
chip_gen: v7x
topology: tpu7x:2x2x1
jax: 0.10.0
libtpu: 0.0.40
codegen_flags: <defaults>
</compile_context>

<pallas_src>
import jax
import jax.numpy as jnp
from jax.experimental import pallas as pl
from jax.experimental.pallas import tpu as pltpu

BN_EPS = 1e-5


def _batchnorm(z, gamma, beta):
    # PyTorch BatchNorm1d, training mode: batch mean, biased variance.
    mu = jnp.mean(z, axis=0, keepdims=True)
    var = jnp.mean((z - mu) ** 2, axis=0, keepdims=True)
    return (z - mu) * jax.lax.rsqrt(var + BN_EPS) * gamma + beta


def residual_block_kernel(
    x_ref,    # (N, D)   f32
    w1_ref,   # (D, D)   bf16  (pre-transposed: y = x @ W)
    b1_ref,   # (1, D)   f32
    g1_ref,   # (1, D)   f32
    be1_ref,  # (1, D)   f32
    w2_ref,   # (D, D)   bf16
    b2_ref,   # (1, D)   f32
    g2_ref,   # (1, D)   f32
    be2_ref,  # (1, D)   f32
    out_ref,  # (N, D)   f32
):
    f32 = jnp.float32
    bf16 = jnp.bfloat16

    x = x_ref[...]  # f32 residual kept at full precision

    # fc1: bf16 x bf16 -> f32 accumulation on the MXU (default precision).
    z = jnp.dot(x.astype(bf16), w1_ref[...], preferred_element_type=f32)
    z = z + b1_ref[...]
    z = _batchnorm(z, g1_ref[...], be1_ref[...])
    z = jnp.maximum(z, 0.0)

    # fc2
    z = jnp.dot(z.astype(bf16), w2_ref[...], preferred_element_type=f32)
    z = z + b2_ref[...]
    z = _batchnorm(z, g2_ref[...], be2_ref[...])

    # residual add + ReLU
    out_ref[...] = jnp.maximum(z + x, 0.0).astype(out_ref.dtype)


def residual_block_forward(params, x):
    n, d = x.shape
    vmem = pl.BlockSpec(memory_space=pltpu.MemorySpace.VMEM)

    args = (
        x,
        params["w1"], params["b1"], params["g1"], params["be1"],
        params["w2"], params["b2"], params["g2"], params["be2"],
    )
    return pl.pallas_call(
        residual_block_kernel,
        out_shape=jax.ShapeDtypeStruct((n, d), jnp.float32),
        in_specs=[vmem] * len(args),
        out_specs=vmem,
    )(*args)


# ----------------------- parameter init (deterministic) -----------------------
def init_params(key, dim):
    k1, k2, kg = jax.random.split(key, 3)

    def linear(k, fan_in, fan_out):
        # PyTorch nn.Linear default init: U(-1/sqrt(fan_in), 1/sqrt(fan_in)).
        bound = 1.0 / (fan_in ** 0.5)
        kw, kb = jax.random.split(k)
        w = jax.random.uniform(kw, (fan_in, fan_out), jnp.float32, -bound, bound)
        b = jax.random.uniform(kb, (1, fan_out), jnp.float32, -bound, bound)
        return w, b

    w1, b1 = linear(k1, dim, dim)
    w2, b2 = linear(k2, dim, dim)

    # BatchNorm affine params (perturbed from the fresh-module 1/0 so the
    # affine path is actually exercised by the correctness check).
    g1 = 1.0 + 0.1 * jax.random.normal(jax.random.fold_in(kg, 0), (1, dim), jnp.float32)
    be1 = 0.1 * jax.random.normal(jax.random.fold_in(kg, 1), (1, dim), jnp.float32)
    g2 = 1.0 + 0.1 * jax.random.normal(jax.random.fold_in(kg, 2), (1, dim), jnp.float32)
    be2 = 0.1 * jax.random.normal(jax.random.fold_in(kg, 3), (1, dim), jnp.float32)

    return {
        # weights stored bf16 (halved HBM->VMEM traffic, MXU-native operands)
        "w1": w1.astype(jnp.bfloat16), "b1": b1, "g1": g1, "be1": be1,
        "w2": w2.astype(jnp.bfloat16), "b2": b2, "g2": g2, "be2": be2,
    }


# ----------------------------- pure-JAX reference -----------------------------
def reference_forward(params, x):
    hp = jax.lax.Precision.HIGHEST
    w1 = params["w1"].astype(jnp.float32)
    w2 = params["w2"].astype(jnp.float32)

    z = jnp.dot(x, w1, precision=hp) + params["b1"]
    z = _batchnorm(z, params["g1"], params["be1"])
    z = jnp.maximum(z, 0.0)
    z = jnp.dot(z, w2, precision=hp) + params["b2"]
    z = _batchnorm(z, params["g2"], params["be2"])
    return jnp.maximum(z + x, 0.0)


if __name__ == "__main__":
    N, DIM = 8, 128  # 8 sublanes x 128 lanes: one full vreg per activation

    key = jax.random.PRNGKey(0)
    kp, kx = jax.random.split(key)
    params = init_params(kp, DIM)
    x = jax.random.normal(kx, (N, DIM), jnp.float32)

    out = residual_block_forward(params, x)
    out = jax.block_until_ready(out)

    ref = reference_forward(params, x)
    assert out.shape == (N, DIM)
    assert bool(jnp.allclose(out, ref, atol=2e-2, rtol=2e-2)), (
        "mismatch vs reference, max abs diff "
        f"{float(jnp.max(jnp.abs(out - ref)))}"
    )
    print("KERNEL_OK")
</pallas_src>

<mosaic_0001>
module attributes {stable_mosaic.version = 11 : i64} {
  func.func @residual_block_kernel(%arg0: memref<8x128xf32, #tpu.memory_space<vmem>>, %arg1: memref<128x128xbf16, #tpu.memory_space<vmem>>, %arg2: memref<1x128xf32, #tpu.memory_space<vmem>>, %arg3: memref<1x128xf32, #tpu.memory_space<vmem>>, %arg4: memref<1x128xf32, #tpu.memory_space<vmem>>, %arg5: memref<128x128xbf16, #tpu.memory_space<vmem>>, %arg6: memref<1x128xf32, #tpu.memory_space<vmem>>, %arg7: memref<1x128xf32, #tpu.memory_space<vmem>>, %arg8: memref<1x128xf32, #tpu.memory_space<vmem>>, %arg9: memref<8x128xf32, #tpu.memory_space<vmem>>) attributes {dimension_semantics = [], scalar_prefetch = 0 : i64, scratch_operands = 0 : i64, tpu.core_type = #tpu.core_type<tc>} {
    %c0 = arith.constant 0 : index
    %c0_0 = arith.constant 0 : index
    %0 = vector.load %arg0[%c0, %c0_0] : memref<8x128xf32, #tpu.memory_space<vmem>>, vector<8x128xf32>
    %1 = arith.truncf %0 : vector<8x128xf32> to vector<8x128xbf16>
    %c0_1 = arith.constant 0 : index
    %c0_2 = arith.constant 0 : index
    %2 = vector.load %arg1[%c0_1, %c0_2] : memref<128x128xbf16, #tpu.memory_space<vmem>>, vector<128x128xbf16>
    %cst = arith.constant dense<0.000000e+00> : vector<8x128xf32>
    %3 = tpu.matmul %1, %2, %cst {dimension_numbers = #tpu.dot_dimension_numbers<[1], [0], [0], [1], [0, 0, 1, 1], [], []>} : vector<8x128xbf16>, vector<128x128xbf16>, vector<8x128xf32> -> vector<8x128xf32>
    %c0_3 = arith.constant 0 : index
    %c0_4 = arith.constant 0 : index
    %4 = vector.load %arg2[%c0_3, %c0_4] : memref<1x128xf32, #tpu.memory_space<vmem>>, vector<1x128xf32>
    %5 = vector.broadcast %4 : vector<1x128xf32> to vector<8x128xf32>
    %6 = arith.addf %3, %5 : vector<8x128xf32>
    %c0_5 = arith.constant 0 : index
    %c0_6 = arith.constant 0 : index
    %7 = vector.load %arg3[%c0_5, %c0_6] : memref<1x128xf32, #tpu.memory_space<vmem>>, vector<1x128xf32>
    %c0_7 = arith.constant 0 : index
    %c0_8 = arith.constant 0 : index
    %8 = vector.load %arg4[%c0_7, %c0_8] : memref<1x128xf32, #tpu.memory_space<vmem>>, vector<1x128xf32>
    %cst_9 = arith.constant dense<0.000000e+00> : vector<128xf32>
    %9 = vector.multi_reduction <add>, %6, %cst_9 [0] : vector<8x128xf32> to vector<128xf32>
    %10 = vector.shape_cast %9 : vector<128xf32> to vector<1x128xf32>
    %cst_10 = arith.constant 8.000000e+00 : f32
    %11 = vector.broadcast %cst_10 : f32 to vector<1x128xf32>
    %12 = arith.divf %10, %11 : vector<1x128xf32>
    %13 = vector.broadcast %12 : vector<1x128xf32> to vector<8x128xf32>
    %14 = arith.subf %6, %13 : vector<8x128xf32>
    %15 = arith.mulf %14, %14 : vector<8x128xf32>
    %cst_11 = arith.constant dense<0.000000e+00> : vector<128xf32>
    %16 = vector.multi_reduction <add>, %15, %cst_11 [0] : vector<8x128xf32> to vector<128xf32>
    %17 = vector.shape_cast %16 : vector<128xf32> to vector<1x128xf32>
    %cst_12 = arith.constant 8.000000e+00 : f32
    %18 = vector.broadcast %cst_12 : f32 to vector<1x128xf32>
    %19 = arith.divf %17, %18 : vector<1x128xf32>
    %20 = vector.broadcast %12 : vector<1x128xf32> to vector<8x128xf32>
    %21 = arith.subf %6, %20 : vector<8x128xf32>
    %cst_13 = arith.constant 9.99999974E-6 : f32
    %22 = vector.broadcast %cst_13 : f32 to vector<1x128xf32>
    %23 = arith.addf %19, %22 : vector<1x128xf32>
    %24 = math.rsqrt %23 : vector<1x128xf32>
    %25 = vector.broadcast %24 : vector<1x128xf32> to vector<8x128xf32>
    %26 = arith.mulf %21, %25 : vector<8x128xf32>
    %27 = vector.broadcast %7 : vector<1x128xf32> to vector<8x128xf32>
    %28 = arith.mulf %26, %27 : vector<8x128xf32>
    %29 = vector.broadcast %8 : vector<1x128xf32> to vector<8x128xf32>
    %30 = arith.addf %28, %29 : vector<8x128xf32>
    %cst_14 = arith.constant 0.000000e+00 : f32
    %31 = vector.broadcast %cst_14 : f32 to vector<8x128xf32>
    %32 = arith.maximumf %30, %31 : vector<8x128xf32>
    %33 = arith.truncf %32 : vector<8x128xf32> to vector<8x128xbf16>
    %c0_15 = arith.constant 0 : index
    %c0_16 = arith.constant 0 : index
    %34 = vector.load %arg5[%c0_15, %c0_16] : memref<128x128xbf16, #tpu.memory_space<vmem>>, vector<128x128xbf16>
    %cst_17 = arith.constant dense<0.000000e+00> : vector<8x128xf32>
    %35 = tpu.matmul %33, %34, %cst_17 {dimension_numbers = #tpu.dot_dimension_numbers<[1], [0], [0], [1], [0, 0, 1, 1], [], []>} : vector<8x128xbf16>, vector<128x128xbf16>, vector<8x128xf32> -> vector<8x128xf32>
    %c0_18 = arith.constant 0 : index
    %c0_19 = arith.constant 0 : index
    %36 = vector.load %arg6[%c0_18, %c0_19] : memref<1x128xf32, #tpu.memory_space<vmem>>, vector<1x128xf32>
    %37 = vector.broadcast %36 : vector<1x128xf32> to vector<8x128xf32>
    %38 = arith.addf %35, %37 : vector<8x128xf32>
    %c0_20 = arith.constant 0 : index
    %c0_21 = arith.constant 0 : index
    %39 = vector.load %arg7[%c0_20, %c0_21] : memref<1x128xf32, #tpu.memory_space<vmem>>, vector<1x128xf32>
    %c0_22 = arith.constant 0 : index
    %c0_23 = arith.constant 0 : index
    %40 = vector.load %arg8[%c0_22, %c0_23] : memref<1x128xf32, #tpu.memory_space<vmem>>, vector<1x128xf32>
    %cst_24 = arith.constant dense<0.000000e+00> : vector<128xf32>
    %41 = vector.multi_reduction <add>, %38, %cst_24 [0] : vector<8x128xf32> to vector<128xf32>
    %42 = vector.shape_cast %41 : vector<128xf32> to vector<1x128xf32>
    %cst_25 = arith.constant 8.000000e+00 : f32
    %43 = vector.broadcast %cst_25 : f32 to vector<1x128xf32>
    %44 = arith.divf %42, %43 : vector<1x128xf32>
    %45 = vector.broadcast %44 : vector<1x128xf32> to vector<8x128xf32>
    %46 = arith.subf %38, %45 : vector<8x128xf32>
    %47 = arith.mulf %46, %46 : vector<8x128xf32>
    %cst_26 = arith.constant dense<0.000000e+00> : vector<128xf32>
    %48 = vector.multi_reduction <add>, %47, %cst_26 [0] : vector<8x128xf32> to vector<128xf32>
    %49 = vector.shape_cast %48 : vector<128xf32> to vector<1x128xf32>
    %cst_27 = arith.constant 8.000000e+00 : f32
    %50 = vector.broadcast %cst_27 : f32 to vector<1x128xf32>
    %51 = arith.divf %49, %50 : vector<1x128xf32>
    %52 = vector.broadcast %44 : vector<1x128xf32> to vector<8x128xf32>
    %53 = arith.subf %38, %52 : vector<8x128xf32>
    %cst_28 = arith.constant 9.99999974E-6 : f32
    %54 = vector.broadcast %cst_28 : f32 to vector<1x128xf32>
    %55 = arith.addf %51, %54 : vector<1x128xf32>
    %56 = math.rsqrt %55 : vector<1x128xf32>
    %57 = vector.broadcast %56 : vector<1x128xf32> to vector<8x128xf32>
    %58 = arith.mulf %53, %57 : vector<8x128xf32>
    %59 = vector.broadcast %39 : vector<1x128xf32> to vector<8x128xf32>
    %60 = arith.mulf %58, %59 : vector<8x128xf32>
    %61 = vector.broadcast %40 : vector<1x128xf32> to vector<8x128xf32>
    %62 = arith.addf %60, %61 : vector<8x128xf32>
    %63 = arith.addf %62, %0 : vector<8x128xf32>
    %cst_29 = arith.constant 0.000000e+00 : f32
    %64 = vector.broadcast %cst_29 : f32 to vector<8x128xf32>
    %65 = arith.maximumf %63, %64 : vector<8x128xf32>
    %c0_30 = arith.constant 0 : index
    %c0_31 = arith.constant 0 : index
    %66 = vector.load %arg9[%c0_30, %c0_31] : memref<8x128xf32, #tpu.memory_space<vmem>>, vector<8x128xf32>
    tpu.vector_store %arg9[%c0_30, %c0_31], %65 {strides = array<i32>} : memref<8x128xf32, #tpu.memory_space<vmem>>, vector<8x128xf32>,
    return
  }
}

</mosaic_0001>

<llo_original>
// kernel: tpu_custom_call.1
$region0: #{tpu_custom_call.1}
  #allocation0 [shape = 'u32[]', space=smem, size = 0x4, offset = 0x4, fixed_abs, tag = 'smem constant byte address 0x4 - core index']
  #allocation1 [shape = 'u32[144,128]{1,0:T(1,128)}', space=vmem, size = 0x12000, scoped, tag = 'internal scratch']
  %s0 = inlined_call_operand.hbm [shape: f32[8,128], index: 0, kind: input, shape index: {}]
  %s1 = inlined_call_operand.hbm [shape: bf16[128,128], index: 1, kind: input, shape index: {}]
  %s2 = inlined_call_operand.vmem [shape: f32[1,128], index: 2, kind: input, shape index: {}]
  %s3 = inlined_call_operand.vmem [shape: f32[1,128], index: 3, kind: input, shape index: {}]
  %s4 = inlined_call_operand.vmem [shape: f32[1,128], index: 4, kind: input, shape index: {}]
  %s5 = inlined_call_operand.hbm [shape: bf16[128,128], index: 5, kind: input, shape index: {}]
  %s6 = inlined_call_operand.vmem [shape: f32[1,128], index: 6, kind: input, shape index: {}]
  %s7 = inlined_call_operand.vmem [shape: f32[1,128], index: 7, kind: input, shape index: {}]
  %s8 = inlined_call_operand.vmem [shape: f32[1,128], index: 8, kind: input, shape index: {}]
  %s9 = inlined_call_operand.hbm [shape: f32[8,128], index: 9, kind: output, shape index: {}]
  %s10 = sld [smem:[#allocation0]]
  $region58: #{tpu_custom_call.1} parent=0
    _
  %s12 = ssub.s32 1, %s10
  %s13 = scalar_select 0, %s12, %s10
  $region1: #{tpu_custom_call.1} parent=0
    #allocation2 [shape = 'u8[4096]{0}', space=vmem, size = 0x1000, scoped, tag = 'input window, operand 0, single buffered']
    #allocation3 [shape = 's32[1]{0}', space=sflag, size = 0x4, scoped, tag = 'scoped memory for tpu_custom_call.1']
    #allocation4 [shape = 's32[1]{0}', space=sflag, size = 0x4, scoped, tag = 'scoped memory for tpu_custom_call.1']
    #allocation5 [shape = 'u8[32768]{0}', space=vmem, size = 0x8000, scoped, tag = 'input window, operand 1, single buffered']
    #allocation6 [shape = 's32[1]{0}', space=sflag, size = 0x4, scoped, tag = 'scoped memory for tpu_custom_call.1']
    #allocation7 [shape = 'u8[32768]{0}', space=vmem, size = 0x8000, scoped, tag = 'input window, operand 5, single buffered']
    #allocation8 [shape = 'u8[4096]{0}', space=vmem, size = 0x1000, scoped, tag = 'output window, operand 0, single buffered']
    %14 = vsyncpa [#allocation3], 0
    %15 = vsyncpa [#allocation6], 0
    %16 = vsyncpa [#allocation4], 0
    // Predicated region
    $region2: #{tpu_custom_call.1} parent=1 // pred_check
      _
    $region3: #{tpu_custom_call.1} parent=1 // pred_check_branch
      %18 = sbr.rel (0) target = $region5
    $region4: #{tpu_custom_call.1} parent=1 // pred_region
      %s20 = ssub.s32 128, 128
      %21 = vsyncadd [#allocation3], %s20
      %s23 = sshll.u32 [#allocation2], 4
      %s24 = int_to_ptr.vmem [resolvable:$true] %s23
      %26 = dma.hbm_to_vmem [thread:$0]  %s0, 128, %s24, [#allocation3]
    $region5: #{tpu_custom_call.1} parent=1 // pred_fallthru
      _
    // Predicated region
    $region6: #{tpu_custom_call.1} parent=1 // pred_check
      _
    $region7: #{tpu_custom_call.1} parent=1 // pred_check_branch
      %28 = sbr.rel (0) target = $region9
    $region8: #{tpu_custom_call.1} parent=1 // pred_region
      %s30 = ssub.s32 1024, 1024
      %31 = vsyncadd [#allocation6], %s30
      %s32 = sshll.u32 [#allocation5], 4
      %s33 = int_to_ptr.vmem [resolvable:$true] %s32
      %38 = dma.hbm_to_vmem [thread:$0]  %s1, 1024, %s33, [#allocation6], 64, 64, 4
    $region9: #{tpu_custom_call.1} parent=1 // pred_fallthru
      _
    // Predicated region
    $region10: #{tpu_custom_call.1} parent=1 // pred_check
      _
    $region11: #{tpu_custom_call.1} parent=1 // pred_check_branch
      %40 = sbr.rel (0) target = $region13
    $region12: #{tpu_custom_call.1} parent=1 // pred_region
      _
    $region13: #{tpu_custom_call.1} parent=1 // pred_fallthru
      _
    // Predicated region
    $region14: #{tpu_custom_call.1} parent=1 // pred_check
      _
    $region15: #{tpu_custom_call.1} parent=1 // pred_check_branch
      %42 = sbr.rel (0) target = $region17
    $region16: #{tpu_custom_call.1} parent=1 // pred_region
      _
    $region17: #{tpu_custom_call.1} parent=1 // pred_fallthru
      _
    // Predicated region
    $region18: #{tpu_custom_call.1} parent=1 // pred_check
      _
    $region19: #{tpu_custom_call.1} parent=1 // pred_check_branch
      %44 = sbr.rel (0) target = $region21
    $region20: #{tpu_custom_call.1} parent=1 // pred_region
      _
    $region21: #{tpu_custom_call.1} parent=1 // pred_fallthru
      _
    // Predicated region
    $region22: #{tpu_custom_call.1} parent=1 // pred_check
      _
    $region23: #{tpu_custom_call.1} parent=1 // pred_check_branch
      %46 = sbr.rel (0) target = $region25
    $region24: #{tpu_custom_call.1} parent=1 // pred_region
      %s48 = ssub.s32 1024, 1024
      %49 = vsyncadd [#allocation6], %s48
      %s50 = sshll.u32 [#allocation7], 4
      %s51 = int_to_ptr.vmem [resolvable:$true] %s50
      %56 = dma.hbm_to_vmem [thread:$0]  %s5, 1024, %s51, [#allocation6], 64, 64, 4
    $region25: #{tpu_custom_call.1} parent=1 // pred_fallthru
      _
    // Predicated region
    $region26: #{tpu_custom_call.1} parent=1 // pred_check
      _
    $region27: #{tpu_custom_call.1} parent=1 // pred_check_branch
      %58 = sbr.rel (0) target = $region29
    $region28: #{tpu_custom_call.1} parent=1 // pred_region
      _
    $region29: #{tpu_custom_call.1} parent=1 // pred_fallthru
      _
    // Predicated region
    $region30: #{tpu_custom_call.1} parent=1 // pred_check
      _
    $region31: #{tpu_custom_call.1} parent=1 // pred_check_branch
      %60 = sbr.rel (0) target = $region33
    $region32: #{tpu_custom_call.1} parent=1 // pred_region
      _
    $region33: #{tpu_custom_call.1} parent=1 // pred_fallthru
      _
    // Predicated region
    $region34: #{tpu_custom_call.1} parent=1 // pred_check
      _
    $region35: #{tpu_custom_call.1} parent=1 // pred_check_branch
      %62 = sbr.rel (0) target = $region37
    $region36: #{tpu_custom_call.1} parent=1 // pred_region
      _
    $region37: #{tpu_custom_call.1} parent=1 // pred_fallthru
      _
    // Predicated region
    $region38: #{tpu_custom_call.1} parent=1 // pred_check
      _
    $region39: #{tpu_custom_call.1} parent=1 // pred_check_branch
      %64 = sbr.rel (0) target = $region41
    $region40: #{tpu_custom_call.1} parent=1 // pred_region
      %65 = dma.done [#allocation3], 128
    $region41: #{tpu_custom_call.1} parent=1 // pred_fallthru
      _
    // Predicated region
    $region42: #{tpu_custom_call.1} parent=1 // pred_check
      _
    $region43: #{tpu_custom_call.1} parent=1 // pred_check_branch
      %67 = sbr.rel (0) target = $region45
    $region44: #{tpu_custom_call.1} parent=1 // pred_region
      %68 = dma.done [#allocation6], 1024
    $region45: #{tpu_custom_call.1} parent=1 // pred_fallthru
      _
    // Predicated region
    $region46: #{tpu_custom_call.1} parent=1 // pred_check
      _
    $region47: #{tpu_custom_call.1} parent=1 // pred_check_branch
      %70 = sbr.rel (0) target = $region49
    $region48: #{tpu_custom_call.1} parent=1 // pred_region
      %71 = dma.done [#allocation6], 1024
    $region49: #{tpu_custom_call.1} parent=1 // pred_fallthru
      _
    %v73 = vld [vmem:[#allocation2] sm:$0xff]
    %v74 = vpack.c.bf16 %v73, %v73
    %v75 = vld [vmem:[#allocation5] sm:$0xf]
    %v76 = vld [vmem:[#allocation5 + $0x4] sm:$0xf]
    %v77 = vld [vmem:[#allocation5 + $0x8] sm:$0xf]
    %v78 = vld [vmem:[#allocation5 + $0xc] sm:$0xf]
    %v79 = vld [vmem:[#allocation5 + $0x10] sm:$0xf]
    %v80 = vld [vmem:[#allocation5 + $0x14] sm:$0xf]
    %v81 = vld [vmem:[#allocation5 + $0x18] sm:$0xf]
    %v82 = vld [vmem:[#allocation5 + $0x1c] sm:$0xf]
    %v83 = vld [vmem:[#allocation5 + $0x20] sm:$0xf]
    %v84 = vld [vmem:[#allocation5 + $0x24] sm:$0xf]
    %v85 = vld [vmem:[#allocation5 + $0x28] sm:$0xf]
    %v86 = vld [vmem:[#allocation5 + $0x2c] sm:$0xf]
    %v87 = vld [vmem:[#allocation5 + $0x30] sm:$0xf]
    %v88 = vld [vmem:[#allocation5 + $0x34] sm:$0xf]
    %v89 = vld [vmem:[#allocation5 + $0x38] sm:$0xf]
    %v90 = vld [vmem:[#allocation5 + $0x3c] sm:$0xf]
    %v91 = vld [vmem:[%s2] sm:$0x1]
    %v93 = vlaneseq
    %v94 = vshrl.u32 %v93, 7
    %v95 = vsub.s32 0, %v94
    %v96 = vrot.slane %v91, %v95
    %v114 = vunpack.c.l.b16 %v75
    %v115 = vunpack.c.l.b16 %v76
    %v116 = vunpack.c.l.b16 %v77
    %v117 = vunpack.c.l.b16 %v78
    %v118 = vunpack.c.l.b16 %v79
    %v119 = vunpack.c.l.b16 %v80
    %v120 = vunpack.c.l.b16 %v81
    %v121 = vunpack.c.l.b16 %v82
    %v122 = vunpack.c.l.b16 %v83
    %v123 = vunpack.c.l.b16 %v84
    %v124 = vunpack.c.l.b16 %v85
    %v125 = vunpack.c.l.b16 %v86
    %v126 = vunpack.c.l.b16 %v87
    %v127 = vunpack.c.l.b16 %v88
    %v128 = vunpack.c.l.b16 %v89
    %v129 = vunpack.c.l.b16 %v90
    %v130 = vpack.c.b16 %v115, %v114
    %v131 = vpack.c.b16 %v117, %v116
    %v132 = vpack.c.b16 %v119, %v118
    %v133 = vpack.c.b16 %v121, %v120
    %v134 = vpack.c.b16 %v123, %v122
    %v135 = vpack.c.b16 %v125, %v124
    %v136 = vpack.c.b16 %v127, %v126
    %v137 = vpack.c.b16 %v129, %v128
    %146 = vmatprep.subr.bf16.mxu0 0
    %147 = vmatpush1.bf16.msra.mxu0 %v130
    %148 = vmatprep.subr.bf16.mxu0 0
    %149 = vmatpush1.bf16.msra.mxu0 %v131
    %150 = vmatprep.subr.bf16.mxu0 0
    %151 = vmatpush1.bf16.msra.mxu0 %v132
    %152 = vmatprep.subr.bf16.mxu0 0
    %153 = vmatpush1.bf16.msra.mxu0 %v133
    %154 = vmatprep.subr.bf16.mxu0 0
    %155 = vmatpush1.bf16.msra.mxu0 %v134
    %156 = vmatprep.subr.bf16.mxu0 0
    %157 = vmatpush1.bf16.msra.mxu0 %v135
    %158 = vmatprep.subr.bf16.mxu0 0
    %159 = vmatpush1.bf16.msra.mxu0 %v136
    %160 = vmatprep.subr.bf16.mxu0 0
    %161 = vmatpush1.bf16.msra.mxu0 %v137
    %162 = vmatprep.subr.bf16.mxu0 0
    %163 = vmatpush1.bf16.msra.mxu0 0
    %164 = vmatprep.subr.bf16.mxu0 0
    %165 = vmatpush1.bf16.msra.mxu0 0
    %166 = vmatprep.subr.bf16.mxu0 0
    %167 = vmatpush1.bf16.msra.mxu0 0
    %168 = vmatprep.subr.bf16.mxu0 0
    %169 = vmatpush1.bf16.msra.mxu0 0
    %170 = vmatprep.subr.bf16.mxu0 0
    %171 = vmatpush1.bf16.msra.mxu0 0
    %172 = vmatprep.subr.bf16.mxu0 0
    %173 = vmatpush1.bf16.msra.mxu0 0
    %174 = vmatprep.subr.bf16.mxu0 0
    %175 = vmatpush1.bf16.msra.mxu0 0
    %176 = vmatprep.subr.bf16.mxu0 0
    %177 = vmatpush1.bf16.msra.mxu0 0
    %178 = vmatprep.mubr.bf16.mxu0 0
    %179 = vmatmul.mubr.bf16.gmra.mrb[0].mxu0 %v74
    %v180 = vpop.f32.mrb[0].mxu0
    %v181 = vadd.f32 %v96, %v180
    %v182 = vpop.f32.mrb[0].mxu0
    %v183 = vpop.f32.mrb[0].mxu0
    %v184 = vpop.f32.mrb[0].mxu0
    %185 = vdwg.mxu0
    %v186 = vld [vmem:[%s3] sm:$0x1]
    %v187 = vld [vmem:[%s4] sm:$0x1]
    %v188 = vrot.slane %v181, 4
    %v189 = vadd.f32 %v181, %v188
    %v190 = vrot.slane %v189, 2
    %v191 = vadd.f32 %v189, %v190
    %v192 = vrot.slane %v191, 1
    %v193 = vadd.f32 %v191, %v192
    %v194 = vrcp.pop 8.0
    %v195 = vmul.f32 %v193, %v194
    %v196 = vsub.f32 %v181, %v195
    %v197 = vmul.f32 %v196, %v196
    %v198 = vrot.slane %v197, 4
    %v199 = vadd.f32 %v197, %v198
    %v200 = vrot.slane %v199, 2
    %v201 = vadd.f32 %v199, %v200
    %v202 = vrot.slane %v201, 1
    %v203 = vadd.f32 %v201, %v202
    %v204 = vmul.f32 %v203, %v194
    %v205 = vadd.f32 %v204, 1e-05
    %v206 = vrsqrt.pop %v205
    %v207 = vmul.f32 %v196, %v206
    %v209 = vlaneseq
    %v210 = vshrl.u32 %v209, 7
    %v211 = vsub.s32 0, %v210
    %v212 = vrot.slane %v186, %v211
    %v214 = vmul.f32 %v207, %v212
    %v216 = vlaneseq
    %v217 = vshrl.u32 %v216, 7
    %v218 = vsub.s32 0, %v217
    %v219 = vrot.slane %v187, %v218
    %v221 = vadd.f32 %v214, %v219
    %v222 = vmax.f32 %v221, 0.0
    %v223 = vpack.c.bf16 %v222, %v222
    %v224 = vld [vmem:[#allocation7] sm:$0xf]
    %v225 = vld [vmem:[#allocation7 + $0x4] sm:$0xf]
    %v226 = vld [vmem:[#allocation7 + $0x8] sm:$0xf]
    %v227 = vld [vmem:[#allocation7 + $0xc] sm:$0xf]
    %v228 = vld [vmem:[#allocation7 + $0x10] sm:$0xf]
    %v229 = vld [vmem:[#allocation7 + $0x14] sm:$0xf]
    %v230 = vld [vmem:[#allocation7 + $0x18] sm:$0xf]
    %v231 = vld [vmem:[#allocation7 + $0x1c] sm:$0xf]
    %v232 = vld [vmem:[#allocation7 + $0x20] sm:$0xf]
    %v233 = vld [vmem:[#allocation7 + $0x24] sm:$0xf]
    %v234 = vld [vmem:[#allocation7 + $0x28] sm:$0xf]
    %v235 = vld [vmem:[#allocation7 + $0x2c] sm:$0xf]
    %v236 = vld [vmem:[#allocation7 + $0x30] sm:$0xf]
    %v237 = vld [vmem:[#allocation7 + $0x34] sm:$0xf]
    %v238 = vld [vmem:[#allocation7 + $0x38] sm:$0xf]
    %v239 = vld [vmem:[#allocation7 + $0x3c] sm:$0xf]
    %v240 = vld [vmem:[%s6] sm:$0x1]
    %v242 = vlaneseq
    %v243 = vshrl.u32 %v242, 7
    %v244 = vsub.s32 0, %v243
    %v245 = vrot.slane %v240, %v244
    %v263 = vunpack.c.l.b16 %v224
    %v264 = vunpack.c.l.b16 %v225
    %v265 = vunpack.c.l.b16 %v226
    %v266 = vunpack.c.l.b16 %v227
    %v267 = vunpack.c.l.b16 %v228
    %v268 = vunpack.c.l.b16 %v229
    %v269 = vunpack.c.l.b16 %v230
    %v270 = vunpack.c.l.b16 %v231
    %v271 = vunpack.c.l.b16 %v232
    %v272 = vunpack.c.l.b16 %v233
    %v273 = vunpack.c.l.b16 %v234
    %v274 = vunpack.c.l.b16 %v235
    %v275 = vunpack.c.l.b16 %v236
    %v276 = vunpack.c.l.b16 %v237
    %v277 = vunpack.c.l.b16 %v238
    %v278 = vunpack.c.l.b16 %v239
    %v279 = vpack.c.b16 %v264, %v263
    %v280 = vpack.c.b16 %v266, %v265
    %v281 = vpack.c.b16 %v268, %v267
    %v282 = vpack.c.b16 %v270, %v269
    %v283 = vpack.c.b16 %v272, %v271
    %v284 = vpack.c.b16 %v274, %v273
    %v285 = vpack.c.b16 %v276, %v275
    %v286 = vpack.c.b16 %v278, %v277
    %295 = vmatprep.subr.bf16.mxu0 0
    %296 = vmatpush1.bf16.msra.mxu0 %v279
    %297 = vmatprep.subr.bf16.mxu0 0
    %298 = vmatpush1.bf16.msra.mxu0 %v280
    %299 = vmatprep.subr.bf16.mxu0 0
    %300 = vmatpush1.bf16.msra.mxu0 %v281
    %301 = vmatprep.subr.bf16.mxu0 0
    %302 = vmatpush1.bf16.msra.mxu0 %v282
    %303 = vmatprep.subr.bf16.mxu0 0
    %304 = vmatpush1.bf16.msra.mxu0 %v283
    %305 = vmatprep.subr.bf16.mxu0 0
    %306 = vmatpush1.bf16.msra.mxu0 %v284
    %307 = vmatprep.subr.bf16.mxu0 0
    %308 = vmatpush1.bf16.msra.mxu0 %v285
    %309 = vmatprep.subr.bf16.mxu0 0
    %310 = vmatpush1.bf16.msra.mxu0 %v286
    %311 = vmatprep.subr.bf16.mxu0 0
    %312 = vmatpush1.bf16.msra.mxu0 0
    %313 = vmatprep.subr.bf16.mxu0 0
    %314 = vmatpush1.bf16.msra.mxu0 0
    %315 = vmatprep.subr.bf16.mxu0 0
    %316 = vmatpush1.bf16.msra.mxu0 0
    %317 = vmatprep.subr.bf16.mxu0 0
    %318 = vmatpush1.bf16.msra.mxu0 0
    %319 = vmatprep.subr.bf16.mxu0 0
    %320 = vmatpush1.bf16.msra.mxu0 0
    %321 = vmatprep.subr.bf16.mxu0 0
    %322 = vmatpush1.bf16.msra.mxu0 0
    %323 = vmatprep.subr.bf16.mxu0 0
    %324 = vmatpush1.bf16.msra.mxu0 0
    %325 = vmatprep.subr.bf16.mxu0 0
    %326 = vmatpush1.bf16.msra.mxu0 0
    %327 = vmatprep.mubr.bf16.mxu0 0
    %328 = vmatmul.mubr.bf16.gmra.mrb[0].mxu0 %v223
    %v329 = vpop.f32.mrb[0].mxu0
    %v330 = vadd.f32 %v245, %v329
    %v331 = vpop.f32.mrb[0].mxu0
    %v332 = vpop.f32.mrb[0].mxu0
    %v333 = vpop.f32.mrb[0].mxu0
    %334 = vdwg.mxu0
    %v335 = vld [vmem:[%s7] sm:$0x1]
    %v336 = vld [vmem:[%s8] sm:$0x1]
    %v337 = vrot.slane %v330, 4
    %v338 = vadd.f32 %v330, %v337
    %v339 = vrot.slane %v338, 2
    %v340 = vadd.f32 %v338, %v339
    %v341 = vrot.slane %v340, 1
    %v342 = vadd.f32 %v340, %v341
    %v343 = vmul.f32 %v342, %v194
    %v344 = vsub.f32 %v330, %v343
    %v345 = vmul.f32 %v344, %v344
    %v346 = vrot.slane %v345, 4
    %v347 = vadd.f32 %v345, %v346
    %v348 = vrot.slane %v347, 2
    %v349 = vadd.f32 %v347, %v348
    %v350 = vrot.slane %v349, 1
    %v351 = vadd.f32 %v349, %v350
    %v352 = vmul.f32 %v351, %v194
    %v353 = vadd.f32 %v352, 1e-05
    %v354 = vrsqrt.pop %v353
    %v355 = vmul.f32 %v344, %v354
    %v357 = vlaneseq
    %v358 = vshrl.u32 %v357, 7
    %v359 = vsub.s32 0, %v358
    %v360 = vrot.slane %v335, %v359
    %v362 = vmul.f32 %v355, %v360
    %v364 = vlaneseq
    %v365 = vshrl.u32 %v364, 7
    %v366 = vsub.s32 0, %v365
    %v367 = vrot.slane %v336, %v366
    %v369 = vadd.f32 %v362, %v367
    %v370 = vadd.f32 %v369, %v73
    %v371 = vmax.f32 %v370, 0.0
    %372 = vst [vmem:[#allocation8] sm:$0xff] %v371
    // Predicated region
    $region50: #{tpu_custom_call.1} parent=1 // pred_check
      _
    $region51: #{tpu_custom_call.1} parent=1 // pred_check_branch
      %374 = sbr.rel (0) target = $region53
    $region52: #{tpu_custom_call.1} parent=1 // pred_region
      %s376 = ssub.s32 128, 128
      %377 = vsyncadd [#allocation4], %s376
      %s379 = sshll.u32 [#allocation8], 4
      %s380 = int_to_ptr.vmem [resolvable:$true] %s379
      %382 = dma.vmem_to_hbm [thread:$0]  %s380, 128, %s9, [#allocation4]
    $region53: #{tpu_custom_call.1} parent=1 // pred_fallthru
      _
    // Predicated region
    $region54: #{tpu_custom_call.1} parent=1 // pred_check
      _
    $region55: #{tpu_custom_call.1} parent=1 // pred_check_branch
      %384 = sbr.rel (0) target = $region57
    $region56: #{tpu_custom_call.1} parent=1 // pred_region
      %385 = dma.done [#allocation4], 128
    $region57: #{tpu_custom_call.1} parent=1 // pred_fallthru
      _
    %386 = vsyncpa [#allocation3], 1
    %387 = vsyncpa [#allocation6], 1
    %388 = vsyncpa [#allocation4], 1

</llo_original>
